<compile_context>
chip_gen: v7x
topology: tpu7x:2x2x1
jax: 0.10.0
libtpu: 0.0.40
codegen_flags: <defaults>
</compile_context>

<pallas_src>
import functools

import jax
import jax.numpy as jnp
from jax import lax
from jax.experimental import pallas as pl
from jax.experimental.pallas import tpu as pltpu


def _round_up(v, mult):
    return ((v + mult - 1) // mult) * mult


def _focal_loss_kernel(gamma, n_rows, tiles_per_core,
                       logits_ref, targets_ref, alpha_ref, out_ref, acc_ref):
    p = pl.program_id(0)   # 2-way "parallel" axis (megacore / 2 TCs on v7x)
    j = pl.program_id(1)   # reduction axis over row tiles

    @pl.when(j == 0)
    def _():
        acc_ref[...] = jnp.zeros_like(acc_ref)

    x = logits_ref[...].astype(jnp.float32)       # (tile_n, C) f32
    tgt = targets_ref[...]                        # (tile_n, 1) int32
    alpha = alpha_ref[...].astype(jnp.float32)    # (1, C)
    tn, c = x.shape

    # --- one-hot select: bool mask + where (no f32 sel tile, no explicit
    #     alpha broadcast); these temporaries die before the exp pass ---
    col_ids = lax.broadcasted_iota(jnp.int32, (tn, c), 1)
    sel = col_ids == tgt                                               # bool
    logit_t = jnp.sum(jnp.where(sel, x, 0.0), axis=-1, keepdims=True)  # (tn,1)
    alpha_t = jnp.sum(jnp.where(sel, alpha, 0.0), axis=-1, keepdims=True)

    # --- numerically stable log-sum-exp over the class (lane) axis ---
    # TODO(synk): on v7x (3.2 TB/s HBM) this full-tile f32 exp is the likely
    # binding unit; a bf16 EUP exp with f32 accumulation would ~2x it but is
    # accuracy-gated, so it is not done here.
    m = jnp.max(x, axis=-1, keepdims=True)
    sumexp = jnp.sum(jnp.exp(x - m), axis=-1, keepdims=True)
    lse = m + jnp.log(sumexp)

    ce = lse - logit_t                              # (tile_n, 1)
    pt = jnp.exp(-ce)                               # == softmax(x)[target]
    u = jnp.maximum(1.0 - pt, 0.0)                  # clamp: no pow(neg) NaN
    if gamma == 2.0:
        focal = u * u
    elif gamma == 1.0:
        focal = u
    elif gamma == 0.0:
        focal = jnp.ones_like(u)
    else:
        focal = u ** gamma

    # mask rows past the real N (ragged last tile / fully out-of-range tiles)
    row0 = (p * tiles_per_core + j) * tn
    row_ids = row0 + lax.broadcasted_iota(jnp.int32, (tn, 1), 0)
    loss = jnp.where(row_ids < n_rows, alpha_t * focal * ce, 0.0)

    # per-row partial sums across the j loop (short f32 addition chains)
    acc_ref[...] += loss

    @pl.when(j == tiles_per_core - 1)
    def _():
        out_ref[...] = jnp.broadcast_to(
            jnp.sum(acc_ref[...], keepdims=True), out_ref.shape)


def focal_loss(logits, targets, alpha, gamma=2.0):
    """logits: (N, C) float, targets: (N,) int, alpha: (C,) float -> mean focal loss."""
    n, c = logits.shape
    itemsize = jnp.dtype(logits.dtype).itemsize

    # sublane multiple for the logits dtype (8 f32 / 16 bf16 / 32 int8-fp8)
    sub = max(8, 32 // itemsize)
    # lane-padded class width: VMEM footprint only -- logits are NOT padded in HBM
    cp = _round_up(c, 128)

    # ---- per-generation VMEM budget (scoped limit ~3/4 of physical VMEM) ----
    try:
        vmem_cap = int(pltpu.get_tpu_info().vmem_capacity_bytes)
    except Exception:
        vmem_cap = 64 * 1024 * 1024                      # v7x-safe fallback
    vmem_limit = min((vmem_cap * 3) // 4, 96 * 1024 * 1024)   # 48 MiB v7x / 96 MiB v5e-v6e
    stream_budget = (vmem_limit * 3) // 4                     # headroom for compiler scratch

    # Per-row VMEM footprint of the streaming state:
    #   2 x logits block (double-buffered, input dtype, lanes padded to cp)
    #   ~4 x full-tile f32/i32 temporaries (f32 cast, exp(x-m), iota/mask, where)
    #   2 x (tile_n, 1) int32 targets block  -> lane-padded to 512 B/row
    #   1 x (tile_n, 1) f32 accumulator      -> 512 B/row
    bytes_per_row = 2 * cp * itemsize + 4 * cp * 4 + 2 * 512 + 512

    rows_by_vmem = max(sub, (stream_budget // bytes_per_row) // sub * sub)
    rows_needed = _round_up(pl.cdiv(n, 2), sub)      # never more than half the rows / core
    tile_n = max(sub, min(rows_by_vmem, rows_needed))
    tiles_per_core = pl.cdiv(n, 2 * tile_n)
    num_row_blocks = pl.cdiv(n, tile_n)              # number of valid logits row-blocks
    n_cover = 2 * tiles_per_core * tile_n
    # TODO(synk): for vocab-scale C (cp * sub * bytes_per_row > budget, C >~ 100K) a
    # class-tile grid axis with an online-softmax carry would be needed.
    # TODO(synk): for tiny C (e.g. C=3) only 3 of 128 lanes do useful work; the kernel
    # is then launch/EUP-overhead bound and plain XLA is competitive.

    # logits stay untouched in HBM; only the tiny targets array is padded (to full
    # grid coverage) and alpha reshaped.  The (tile_n, 1) targets block is lane-padded
    # in VMEM (512 B/row) -- accounted for in bytes_per_row above.
    targets_p = jnp.pad(targets.astype(jnp.int32), (0, n_cover - n)).reshape(n_cover, 1)
    alpha_p = alpha.astype(jnp.float32).reshape(1, c)

    # clamp the logits block index so no request starts past the last valid block;
    # the ragged tail of that block is neutralized by the in-kernel row mask.
    last_blk = num_row_blocks - 1

    def logits_block(p, j):
        return (jnp.minimum(p * tiles_per_core + j, last_blk), 0)

    kernel = functools.partial(_focal_loss_kernel, float(gamma), n, tiles_per_core)

    out = pl.pallas_call(
        kernel,
        out_shape=jax.ShapeDtypeStruct((2, 8, 128), jnp.float32),
        grid_spec=pltpu.PrefetchScalarGridSpec(
            num_scalar_prefetch=0,
            grid=(2, tiles_per_core),
            in_specs=[
                pl.BlockSpec((tile_n, c), logits_block),          # full C, no HBM pad
                pl.BlockSpec((tile_n, 1),
                             lambda p, j: (p * tiles_per_core + j, 0)),
                pl.BlockSpec((1, c), lambda p, j: (0, 0)),
            ],
            out_specs=pl.BlockSpec((1, 8, 128), lambda p, j: (p, 0, 0)),
            scratch_shapes=[pltpu.VMEM((tile_n, 1), jnp.float32)],
        ),
        compiler_params=pltpu.CompilerParams(
            # TODO(synk): on v7x verify in xprof that this axis shards across both
            # TensorCores; if not, switch it to pltpu.CORE_PARALLEL.
            dimension_semantics=("parallel", "arbitrary"),
            vmem_limit_bytes=int(vmem_limit),
        ),
    )(logits, targets_p, alpha_p)

    return (out[0, 0, 0] + out[1, 0, 0]) / jnp.float32(n)


def focal_loss_ref(logits, targets, alpha, gamma=2.0):
    """Pure-JAX reference matching the PyTorch module."""
    logp = jax.nn.log_softmax(logits.astype(jnp.float32), axis=-1)
    ce = -jnp.take_along_axis(logp, targets[:, None], axis=-1)[:, 0]
    pt = jnp.exp(-ce)
    alpha_t = alpha[targets]
    return jnp.mean(alpha_t * (1.0 - pt) ** gamma * ce)


if __name__ == "__main__":
    key = jax.random.PRNGKey(0)
    k1, k2 = jax.random.split(key)

    N, C = 8, 3  # module default alpha = tensor([1., 1., 1.]) implies 3 classes
    logits = jax.random.normal(k1, (N, C), dtype=jnp.float32)
    targets = jax.random.randint(k2, (N,), 0, C, dtype=jnp.int32)
    alpha = jnp.array([1.0, 1.0, 1.0], dtype=jnp.float32)
    gamma = 2.0

    out = focal_loss(logits, targets, alpha, gamma)
    out = jax.block_until_ready(out)

    ref = focal_loss_ref(logits, targets, alpha, gamma)
    assert jnp.allclose(out, ref, rtol=1e-5, atol=1e-6), (out, ref)

    print("KERNEL_OK")
</pallas_src>

<mosaic_0001>
module attributes {stable_mosaic.version = 11 : i64} {
  func.func @_focal_loss_kernel(%arg0: i32, %arg1: i32, %arg2: memref<8x3xf32, #tpu.memory_space<vmem>>, %arg3: memref<8x1xi32, #tpu.memory_space<vmem>>, %arg4: memref<1x3xf32, #tpu.memory_space<vmem>>, %arg5: memref<1x8x128xf32, #tpu.memory_space<vmem>>, %arg6: memref<8x1xf32, #tpu.memory_space<vmem>>) attributes {dimension_semantics = [#tpu.dimension_semantics<parallel>, #tpu.dimension_semantics<arbitrary>], iteration_bounds = array<i64: 2, 1>, scalar_prefetch = 0 : i64, scratch_operands = 1 : i64, tpu.core_type = #tpu.core_type<tc>, window_params = [{transform_indices = @transform_0, window_bounds = array<i64: 8, 3>}, {transform_indices = @transform_1, window_bounds = array<i64: 8, 1>}, {pipeline_mode = #tpu.pipeline_mode<synchronous>, transform_indices = @transform_2, window_bounds = array<i64: 1, 3>}, {transform_indices = @transform_3, window_bounds = array<i64: 1, 8, 128>}]} {
    %c0_i32 = arith.constant 0 : i32
    %0 = arith.cmpi eq, %arg1, %c0_i32 : i32
    %1 = arith.extui %0 : i1 to i32
    %c0_i32_0 = arith.constant 0 : i32
    %2 = arith.cmpi ne, %1, %c0_i32_0 : i32
    scf.if %2 {
      %cst_22 = arith.constant 0.000000e+00 : f32
      %55 = vector.broadcast %cst_22 : f32 to vector<8x1xf32>
      %c0_23 = arith.constant 0 : index
      %c0_24 = arith.constant 0 : index
      %56 = vector.load %arg6[%c0_23, %c0_24] : memref<8x1xf32, #tpu.memory_space<vmem>>, vector<8x1xf32>
      tpu.vector_store %arg6[%c0_23, %c0_24], %55 {strides = array<i32>} : memref<8x1xf32, #tpu.memory_space<vmem>>, vector<8x1xf32>,
    } else {
    }
    %c0 = arith.constant 0 : index
    %c0_1 = arith.constant 0 : index
    %3 = vector.load %arg2[%c0, %c0_1] : memref<8x3xf32, #tpu.memory_space<vmem>>, vector<8x3xf32>
    %c0_2 = arith.constant 0 : index
    %c0_3 = arith.constant 0 : index
    %4 = vector.load %arg3[%c0_2, %c0_3] : memref<8x1xi32, #tpu.memory_space<vmem>>, vector<8x1xi32>
    %c0_4 = arith.constant 0 : index
    %c0_5 = arith.constant 0 : index
    %5 = vector.load %arg4[%c0_4, %c0_5] : memref<1x3xf32, #tpu.memory_space<vmem>>, vector<1x3xf32>
    %6 = tpu.iota {dimensions = array<i32: 1>} : vector<8x3xi32>
    %7 = vector.broadcast %4 : vector<8x1xi32> to vector<8x3xi32>
    %8 = arith.cmpi eq, %6, %7 : vector<8x3xi32>
    %cst = arith.constant 0.000000e+00 : f32
    %9 = vector.broadcast %cst : f32 to vector<8x3xf32>
    %10 = arith.select %8, %3, %9 : vector<8x3xi1>, vector<8x3xf32>
    %cst_6 = arith.constant dense<0.000000e+00> : vector<8xf32>
    %11 = vector.multi_reduction <add>, %10, %cst_6 [1] : vector<8x3xf32> to vector<8xf32>
    %12 = vector.shape_cast %11 : vector<8xf32> to vector<8x1xf32>
    %cst_7 = arith.constant 0.000000e+00 : f32
    %13 = vector.shape_cast %5 : vector<1x3xf32> to vector<1x3xf32>
    %14 = vector.broadcast %13 : vector<1x3xf32> to vector<8x3xf32>
    %15 = vector.broadcast %cst_7 : f32 to vector<8x3xf32>
    %16 = arith.select %8, %14, %15 : vector<8x3xi1>, vector<8x3xf32>
    %cst_8 = arith.constant dense<0.000000e+00> : vector<8xf32>
    %17 = vector.multi_reduction <add>, %16, %cst_8 [1] : vector<8x3xf32> to vector<8xf32>
    %18 = vector.shape_cast %17 : vector<8xf32> to vector<8x1xf32>
    %cst_9 = arith.constant dense<0xFF800000> : vector<8xf32>
    %19 = vector.multi_reduction <maximumf>, %3, %cst_9 [1] : vector<8x3xf32> to vector<8xf32>
    %20 = vector.shape_cast %19 : vector<8xf32> to vector<8x1xf32>
    %21 = vector.broadcast %20 : vector<8x1xf32> to vector<8x3xf32>
    %22 = arith.subf %3, %21 : vector<8x3xf32>
    %23 = math.exp %22 : vector<8x3xf32>
    %cst_10 = arith.constant dense<0.000000e+00> : vector<8xf32>
    %24 = vector.multi_reduction <add>, %23, %cst_10 [1] : vector<8x3xf32> to vector<8xf32>
    %25 = vector.shape_cast %24 : vector<8xf32> to vector<8x1xf32>
    %26 = math.log %25 : vector<8x1xf32>
    %27 = arith.addf %20, %26 : vector<8x1xf32>
    %28 = arith.subf %27, %12 : vector<8x1xf32>
    %cst_11 = arith.constant 0.000000e+00 : f32
    %29 = vector.broadcast %cst_11 : f32 to vector<8x1xf32>
    %30 = arith.subf %29, %28 : vector<8x1xf32>
    %31 = math.exp %30 : vector<8x1xf32>
    %cst_12 = arith.constant 1.000000e+00 : f32
    %32 = vector.broadcast %cst_12 : f32 to vector<8x1xf32>
    %33 = arith.subf %32, %31 : vector<8x1xf32>
    %cst_13 = arith.constant 0.000000e+00 : f32
    %34 = vector.broadcast %cst_13 : f32 to vector<8x1xf32>
    %35 = arith.maximumf %33, %34 : vector<8x1xf32>
    %36 = arith.mulf %35, %35 : vector<8x1xf32>
    %c1_i32 = arith.constant 1 : i32
    %37 = arith.muli %arg0, %c1_i32 : i32
    %38 = arith.addi %37, %arg1 : i32
    %c8_i32 = arith.constant 8 : i32
    %39 = arith.muli %38, %c8_i32 : i32
    %40 = tpu.iota {dimensions = array<i32: 0>} : vector<8x1xi32>
    %41 = vector.broadcast %39 : i32 to vector<8x1xi32>
    %42 = arith.addi %41, %40 : vector<8x1xi32>
    %c8_i32_14 = arith.constant 8 : i32
    %43 = vector.broadcast %c8_i32_14 : i32 to vector<8x1xi32>
    %44 = arith.cmpi slt, %42, %43 : vector<8x1xi32>
    %45 = arith.mulf %18, %36 : vector<8x1xf32>
    %46 = arith.mulf %45, %28 : vector<8x1xf32>
    %cst_15 = arith.constant 0.000000e+00 : f32
    %47 = vector.broadcast %cst_15 : f32 to vector<8x1xf32>
    %48 = arith.select %44, %46, %47 : vector<8x1xi1>, vector<8x1xf32>
    %c0_16 = arith.constant 0 : index
    %c0_17 = arith.constant 0 : index
    %49 = vector.load %arg6[%c0_16, %c0_17] : memref<8x1xf32, #tpu.memory_space<vmem>>, vector<8x1xf32>
    %50 = arith.addf %49, %48 : vector<8x1xf32>
    %c0_18 = arith.constant 0 : index
    %c0_19 = arith.constant 0 : index
    %51 = vector.load %arg6[%c0_18, %c0_19] : memref<8x1xf32, #tpu.memory_space<vmem>>, vector<8x1xf32>
    tpu.vector_store %arg6[%c0_18, %c0_19], %50 {strides = array<i32>} : memref<8x1xf32, #tpu.memory_space<vmem>>, vector<8x1xf32>,
    %c0_i32_20 = arith.constant 0 : i32
    %52 = arith.cmpi eq, %arg1, %c0_i32_20 : i32
    %53 = arith.extui %52 : i1 to i32
    %c0_i32_21 = arith.constant 0 : i32
    %54 = arith.cmpi ne, %53, %c0_i32_21 : i32
    scf.if %54 {
      %c0_22 = arith.constant 0 : index
      %c0_23 = arith.constant 0 : index
      %55 = vector.load %arg6[%c0_22, %c0_23] : memref<8x1xf32, #tpu.memory_space<vmem>>, vector<8x1xf32>
      %56 = vector.shape_cast %55 : vector<8x1xf32> to vector<1x8x1xf32>
      %cst_24 = arith.constant dense<0.000000e+00> : vector<1xf32>
      %57 = vector.multi_reduction <add>, %56, %cst_24 [1, 2] : vector<1x8x1xf32> to vector<1xf32>
      %58 = vector.shape_cast %57 : vector<1xf32> to vector<1x1x1xf32>
      %59 = vector.extract %58[0, 0, 0] : f32 from vector<1x1x1xf32>
      %60 = vector.broadcast %59 : f32 to vector<1x1xf32>
      %61 = vector.shape_cast %60 : vector<1x1xf32> to vector<1x1x1xf32>
      %62 = vector.broadcast %61 : vector<1x1x1xf32> to vector<1x8x128xf32>
      %c0_25 = arith.constant 0 : index
      %c0_26 = arith.constant 0 : index
      %c0_27 = arith.constant 0 : index
      %63 = vector.load %arg5[%c0_25, %c0_26, %c0_27] : memref<1x8x128xf32, #tpu.memory_space<vmem>>, vector<1x8x128xf32>
      tpu.vector_store %arg5[%c0_25, %c0_26, %c0_27], %62 {strides = array<i32>} : memref<1x8x128xf32, #tpu.memory_space<vmem>>, vector<1x8x128xf32>,
    } else {
    }
    return
  }
  func.func @transform_0(%arg0: i32, %arg1: i32) -> (i32, i32) {
    %c1_i32 = arith.constant 1 : i32
    %0 = arith.muli %arg0, %c1_i32 : i32
    %1 = arith.addi %0, %arg1 : i32
    %c0_i32 = arith.constant 0 : i32
    %2 = arith.minsi %1, %c0_i32 : i32
    %c0_i32_0 = arith.constant 0 : i32
    %c0_i32_1 = arith.constant 0 : i32
    return %2, %c0_i32_0 : i32, i32
  }
  func.func @transform_1(%arg0: i32, %arg1: i32) -> (i32, i32) {
    %c1_i32 = arith.constant 1 : i32
    %0 = arith.muli %arg0, %c1_i32 : i32
    %1 = arith.addi %0, %arg1 : i32
    %c0_i32 = arith.constant 0 : i32
    %c0_i32_0 = arith.constant 0 : i32
    return %1, %c0_i32 : i32, i32
  }
  func.func @transform_2(%arg0: i32, %arg1: i32) -> (i32, i32) {
    %c0_i32 = arith.constant 0 : i32
    %c0_i32_0 = arith.constant 0 : i32
    %c0_i32_1 = arith.constant 0 : i32
    return %c0_i32, %c0_i32_0 : i32, i32
  }
  func.func @transform_3(%arg0: i32, %arg1: i32) -> (i32, i32, i32) {
    %c0_i32 = arith.constant 0 : i32
    %c0_i32_0 = arith.constant 0 : i32
    %c0_i32_1 = arith.constant 0 : i32
    return %arg0, %c0_i32, %c0_i32_0 : i32, i32, i32
  }
}

</mosaic_0001>

<llo_original>
// kernel: tpu_custom_call.1
$region0: #{tpu_custom_call.1}
  #allocation0 [shape = 'u32[]', space=smem, size = 0x4, offset = 0x4, fixed_abs, tag = 'smem constant byte address 0x4 - core index']
  #allocation1 [shape = 'u32[144,128]{1,0:T(1,128)}', space=vmem, size = 0x12000, scoped, tag = 'internal scratch']
  #allocation2 [shape = 'f32[8,1]{1,0:T(8,128)}', space=vmem, size = 0x1000, scoped, tag = 'scratch operand']
  %s0 = inlined_call_operand.vmem [shape: f32[8,3], index: 0, kind: input, shape index: {}]
  %s1 = inlined_call_operand.vmem [shape: s32[16,1], index: 1, kind: input, shape index: {}]
  %s2 = inlined_call_operand.vmem [shape: f32[1,3], index: 2, kind: input, shape index: {}]
  %s3 = inlined_call_operand.hbm [shape: f32[2,8,128], index: 3, kind: output, shape index: {}]
  %s4 = sld [smem:[#allocation0]]
  $region53: #{tpu_custom_call.1} parent=0
    _
  %s6 = ssub.s32 1, %s4
  %s7 = scalar_select 0, %s6, %s4
  $region1: #{tpu_custom_call.1} parent=0
    #allocation3 [shape = 'u8[8192]{0}', space=vmem, size = 0x2000, scoped, tag = 'output window, operand 0']
    #allocation4 [shape = 's32[2]{0}', space=sflag, size = 0x8, scoped, tag = 'scoped memory for tpu_custom_call.1']
    %8 = vsyncpa [#allocation4], 0
    %s9 = scalar_lea.sflag [#allocation4], 1
    %10 = vsyncpa %s9, 0
    loop: start=0, step=1, limit=4
    $region2: #{tpu_custom_call.1} parent=1 // loop_pre_header
      _
    $region3: #{tpu_custom_call.1} parent=1 // loop_header
      %s12 = sphi 0, %s16
      %p13 = scmp.ge.s32.totalorder %s12, 4
      %s19 = sphi 0, %s31
      %s20 = sphi 0, %s27
      %s21 = sphi 0, %s19
      %s22 = sphi 0, %s20
      %s23 = sphi 0, %s21
      %s24 = sphi 0, %s22
      %s40 = sphi 0, %s42
      %s43 = sphi 0, %s40
      %s44 = sphi 0, %s43
      %s60 = sphi 0, %s44
      %s68 = sphi 0, %s70
      %s71 = sphi 0, %s68
      %s72 = sphi 0, %s71
      %s88 = sphi 0, %s72
      %s92 = sphi 0, %s92
      %s94 = sphi 0, %s92
      %s95 = sphi 0, %s94
      %s109 = sphi 0, %s95
      %s115 = sphi 0, %s117
      %s118 = sphi 0, %s115
      %s119 = sphi 0, %s118
      %s135 = sphi 0, %s119
    $region4: #{tpu_custom_call.1} parent=1 // loop_header_branch
      %15 = sbr.rel (%p13) target = $region8
    $region5: #{tpu_custom_call.1} parent=1 // loop_body
      %s17 = ssub.s32 %s12, 1
      %s18 = ssub.s32 %s12, 2
      %s25 = sadd.s32 1, %s20
      %p26 = scmp.ge.s32.totalorder %s25, 1
      %s27 = scalar_select %p26, 0, %s25
      %s28 = sadd.s32 1, %s19
      %s29 = scalar_select %p26, %s28, %s19
      %p30 = scmp.ge.s32.totalorder %s29, 2
      %s31 = scalar_select %p30, 0, %s29
      %s32 = sadd.s32 %s19, %s20
      %p33 = scmp.lt.s32.totalorder %s32, 0
      %s34 = scalar_select %p33, %s32, 0
      %s35 = sadd.s32 %s31, %s27
      %p36 = scmp.lt.s32.totalorder %s35, 0
      %s37 = scalar_select %p36, %s35, 0
      %s38 = ssub.s32 %s34, %s37
      %p39 = scmp.eq.s32.totalorder %s38, 0
      %s41 = sadd.s32 %s40, 1
      %s42 = scalar_select %p39, %s40, %s41
      %p45 = pneg %p39
      %p46 = scmp.eq.s32.totalorder %s12, 1
      %p47 = por %p45, %p46
      %p48 = scmp.ne.s32.totalorder %s40, %s43
      %p49 = scmp.eq.s32.totalorder %s12, 0
      %p50 = por %p48, %p49
      %p51 = scmp.ne.s32.totalorder %s40, %s43
      %p52 = scmp.eq.s32.totalorder %s17, 1
      %p53 = por %p51, %p52
      %p54 = scmp.ne.s32.totalorder %s43, %s44
      %p55 = scmp.eq.s32.totalorder %s17, 0
      %p56 = por %p54, %p55
      %p57 = scmp.ne.s32.totalorder %s43, %s44
      %p58 = scmp.eq.s32.totalorder %s18, 1
      %p59 = por %p57, %p58
      %p61 = scmp.ne.s32.totalorder %s44, %s60
      %p62 = scmp.eq.s32.totalorder %s18, 0
      %p63 = por %p61, %p62
      %s64 = sadd.s32 %s19, %s20
      %s65 = sadd.s32 %s31, %s27
      %s66 = ssub.s32 %s64, %s65
      %p67 = scmp.eq.s32.totalorder %s66, 0
      %s69 = sadd.s32 %s68, 1
      %s70 = scalar_select %p67, %s68, %s69
      %p73 = pneg %p67
      %p74 = scmp.eq.s32.totalorder %s12, 1
      %p75 = por %p73, %p74
      %p76 = scmp.ne.s32.totalorder %s68, %s71
      %p77 = scmp.eq.s32.totalorder %s12, 0
      %p78 = por %p76, %p77
      %p79 = scmp.ne.s32.totalorder %s68, %s71
      %p80 = scmp.eq.s32.totalorder %s17, 1
      %p81 = por %p79, %p80
      %p82 = scmp.ne.s32.totalorder %s71, %s72
      %p83 = scmp.eq.s32.totalorder %s17, 0
      %p84 = por %p82, %p83
      %p85 = scmp.ne.s32.totalorder %s71, %s72
      %p86 = scmp.eq.s32.totalorder %s18, 1
      %p87 = por %p85, %p86
      %p89 = scmp.ne.s32.totalorder %s72, %s88
      %p90 = scmp.eq.s32.totalorder %s18, 0
      %p91 = por %p89, %p90
      %s93 = sadd.s32 %s92, 1
      %p96 = scmp.eq.s32.totalorder %s12, 1
      %p97 = scmp.ne.s32.totalorder %s92, %s94
      %p98 = scmp.eq.s32.totalorder %s12, 0
      %p99 = por %p97, %p98
      %p100 = scmp.ne.s32.totalorder %s92, %s94
      %p101 = scmp.eq.s32.totalorder %s17, 1
      %p102 = por %p100, %p101
      %p103 = scmp.ne.s32.totalorder %s94, %s95
      %p104 = scmp.eq.s32.totalorder %s17, 0
      %p105 = por %p103, %p104
      %p106 = scmp.ne.s32.totalorder %s94, %s95
      %p107 = scmp.eq.s32.totalorder %s18, 1
      %p108 = por %p106, %p107
      %p110 = scmp.ne.s32.totalorder %s95, %s109
      %p111 = scmp.eq.s32.totalorder %s18, 0
      %p112 = por %p110, %p111
      %s113 = ssub.s32 %s19, %s31
      %p114 = scmp.eq.s32.totalorder %s113, 0
      %s116 = sadd.s32 %s115, 1
      %s117 = scalar_select %p114, %s115, %s116
      %p120 = pneg %p114
      %p121 = scmp.eq.s32.totalorder %s12, 1
      %p122 = por %p120, %p121
      %p123 = scmp.ne.s32.totalorder %s115, %s118
      %p124 = scmp.eq.s32.totalorder %s12, 0
      %p125 = por %p123, %p124
      %p126 = scmp.ne.s32.totalorder %s115, %s118
      %p127 = scmp.eq.s32.totalorder %s17, 1
      %p128 = por %p126, %p127
      %p129 = scmp.ne.s32.totalorder %s118, %s119
      %p130 = scmp.eq.s32.totalorder %s17, 0
      %p131 = por %p129, %p130
      %p132 = scmp.ne.s32.totalorder %s118, %s119
      %p133 = scmp.eq.s32.totalorder %s18, 1
      %p134 = por %p132, %p133
      %p136 = scmp.ne.s32.totalorder %s119, %s135
      %p137 = scmp.eq.s32.totalorder %s18, 0
      %p138 = por %p136, %p137
      %p139 = scmp.le.s32.totalorder 1, %s12
      %p140 = scmp.lt.s32.totalorder %s12, 3
      %p141 = pnand %p139, %p140
      %p142 = pneg %p141
      // Predicated region
      $region9: #{tpu_custom_call.1} parent=5 // pred_check
        _
      $region10: #{tpu_custom_call.1} parent=5 // pred_check_branch
        %144 = sbr.rel (%p141) target = $region12
      $region11: #{tpu_custom_call.1} parent=5 // pred_region
        %s145 = ssub.s32 %s12, 1
        // Predicated region
        $region13: #{tpu_custom_call.1} parent=11 // pred_check
          %p146 = pneg %p105
        $region14: #{tpu_custom_call.1} parent=11 // pred_check_branch
          %148 = sbr.rel (%p146) target = $region16
        $region15: #{tpu_custom_call.1} parent=11 // pred_region
          _
        $region16: #{tpu_custom_call.1} parent=11 // pred_fallthru
          _
      $region12: #{tpu_custom_call.1} parent=5 // pred_fallthru
        _
      %p149 = scmp.lt.s32.totalorder %s12, 2
      // Predicated region
      $region17: #{tpu_custom_call.1} parent=5 // pred_check
        %p150 = pneg %p149
      $region18: #{tpu_custom_call.1} parent=5 // pred_check_branch
        %152 = sbr.rel (%p150) target = $region20
      $region19: #{tpu_custom_call.1} parent=5 // pred_region
        // Predicated region
        $region21: #{tpu_custom_call.1} parent=19 // pred_check
          %p153 = pneg %p50
        $region22: #{tpu_custom_call.1} parent=19 // pred_check_branch
          %155 = sbr.rel (%p153) target = $region24
        $region23: #{tpu_custom_call.1} parent=19 // pred_region
          %s156 = sadd.s32 %s19, %s20
          %p157 = scmp.lt.s32.totalorder %s156, 0
          %s158 = scalar_select %p157, %s156, 0
          %p159 = scmp.lt.s32.totalorder %s158, 0
          %s160 = scalar_select %p159, %s158, 0
          %s161 = smul.addr %s160, 8
          %s162 = scalar_lea.vmem %s0, %s161
          %s163 = sadd.s32 %s19, %s20
          %p164 = scmp.lt.s32.totalorder %s163, 0
          %s165 = scalar_select %p164, %s163, 0
        $region24: #{tpu_custom_call.1} parent=19 // pred_fallthru
          _
        // Predicated region
        $region25: #{tpu_custom_call.1} parent=19 // pred_check
          %p166 = pneg %p78
        $region26: #{tpu_custom_call.1} parent=19 // pred_check_branch
          %168 = sbr.rel (%p166) target = $region28
        $region27: #{tpu_custom_call.1} parent=19 // pred_region
          %s169 = sadd.s32 %s19, %s20
          %p170 = scmp.lt.s32.totalorder %s169, 1
          %s171 = scalar_select %p170, %s169, 1
          %s172 = smul.addr %s171, 8
          %s173 = scalar_lea.vmem %s1, %s172
          %s174 = sadd.s32 %s19, %s20
        $region28: #{tpu_custom_call.1} parent=19 // pred_fallthru
          _
      $region20: #{tpu_custom_call.1} parent=5 // pred_fallthru
        _
      %p175 = scmp.le.s32.totalorder 1, %s12
      %p176 = scmp.lt.s32.totalorder %s12, 3
      %p177 = pnand %p175, %p176
      %p178 = pneg %p177
      // Predicated region
      $region29: #{tpu_custom_call.1} parent=5 // pred_check
        _
      $region30: #{tpu_custom_call.1} parent=5 // pred_check_branch
        %180 = sbr.rel (%p177) target = $region32
      $region31: #{tpu_custom_call.1} parent=5 // pred_region
        %s181 = ssub.s32 %s12, 1
        %s182 = sadd.s32 %s21, %s22
        %p183 = scmp.lt.s32.totalorder %s182, 0
        %s184 = scalar_select %p183, %s182, 0
        %p185 = scmp.lt.s32.totalorder %s184, 0
        %s186 = scalar_select %p185, %s184, 0
        %s187 = smul.addr %s186, 8
        %s188 = scalar_lea.vmem %s0, %s187
        %p189 = pneg %p56
        %p190 = pneg %p53
        %s191 = sadd.s32 %s21, %s22
        %p192 = scmp.lt.s32.totalorder %s191, 1
        %s193 = scalar_select %p192, %s191, 1
        %s194 = smul.addr %s193, 8
        %s195 = scalar_lea.vmem %s1, %s194
        %p196 = pneg %p84
        %p197 = pneg %p81
        %p198 = pneg %p105
        %p199 = pneg %p102
        %p200 = pneg %p131
        %p201 = pneg %p128
        %s202 = sand.u32 %s118, 1
        %s203 = scalar_lea.sflag [#allocation4], %s202
        %s204 = sand.u32 %s118, 1
        %s205 = smul.addr %s204, 8
        %s206 = scalar_lea.vmem [#allocation3], %s205
        %s207 = sadd.s32 %s21, %s22
        %p208 = scmp.lt.s32.totalorder %s207, 0
        %s209 = scalar_select %p208, %s207, 0
        %p210 = scmp.lt.s32.totalorder %s209, 0
        %s211 = scalar_select %p210, %s209, 0
        %s212 = smul.addr %s211, 8
        %s213 = scalar_lea.vmem %s0, %s212
        %s214 = sadd.s32 %s21, %s22
        %p215 = scmp.lt.s32.totalorder %s214, 0
        %s216 = scalar_select %p215, %s214, 0
        %s217 = sadd.s32 %s21, %s22
        %p218 = scmp.lt.s32.totalorder %s217, 1
        %s219 = scalar_select %p218, %s217, 1
        %s220 = smul.addr %s219, 8
        %s221 = scalar_lea.vmem %s1, %s220
        %s222 = sadd.s32 %s21, %s22
        %p223 = scmp.eq.s32.totalorder %s22, 0
        // Predicated region
        $region33: #{tpu_custom_call.1} parent=31 // pred_check
          %p224 = pneg %p223
        $region34: #{tpu_custom_call.1} parent=31 // pred_check_branch
          %226 = sbr.rel (%p224) target = $region36
        $region35: #{tpu_custom_call.1} parent=31 // pred_region
          %vm227 = vcmask 7168
          %228 = vst.msk [vmem:[#allocation2] sm:$0xff] %vm227, 0.0
        $region36: #{tpu_custom_call.1} parent=31 // pred_fallthru
          _
        %v229 = vld [vmem:[%s213] sm:$0xff]
        %v230 = vld [vmem:[%s221] sm:$0xff]
        %v231 = vld [vmem:[%s2] sm:$0x1]
        %v232 = vlaneseq
        %v233 = vand.u32 %v232, 127
        %234 = vset.pattern.permute.xlu0 0
        %235 = vperm.xlu0 %234, %v230
        %v236 = vpop.permute.xlu0 %235
        %vm237 = vcmp.eq.s32.totalorder %v233, %v236
        %v238 = vsel %vm237, %v229, 0.0
        %vm239 = vcmask 23552
        %v240 = vsel %vm239, %v238, 0.0
        %241 = vadd.xlane.f32.xlu0 %v240
        %v242 = vpop.xlane.xlu0 %241
        %v244 = vlaneseq
        %v245 = vshrl.u32 %v244, 7
        %v246 = vsub.s32 0, %v245
        %v247 = vrot.slane %v231, %v246
        %v249 = vsel %vm237, %v247, 0.0
        %v250 = vsel %vm239, %v249, 0.0
        %251 = vadd.xlane.f32.xlu0 %v250
        %v252 = vpop.xlane.xlu0 %251
        %v253 = vsel %vm239, %v229, -inf
        %254 = vmax.xlane.f32.xlu0 %v253
        %v255 = vpop.xlane.xlu0 %254
        %v256 = vsub.f32 %v229, %v255
        %v257 = vmul.f32 %v256, 1.442695
        %v258 = vpow.pop %v257
        %v259 = vsel %vm239, %v258, 0.0
        %260 = vadd.xlane.f32.xlu0 %v259
        %v261 = vpop.xlane.xlu0 %260
        %v262 = vlog2.pop %v261
        %v263 = vmul.f32 %v262, 0.6931472
        %v264 = vadd.f32 %v255, %v263
        %v265 = vsub.f32 %v264, %v242
        %v266 = vsub.f32 0.0, %v265
        %v267 = vmul.f32 %v266, 1.442695
        %v268 = vpow.pop %v267
        %v269 = vsub.f32 1.0, %v268
        %v270 = vmax.f32 %v269, 0.0
        %v271 = vmul.f32 %v270, %v270
        %s272 = sadd.s32 %s21, %s22
        %s273 = smul.u32 %s272, 8
        %v274 = vlaneseq
        %v275 = vshrl.u32 %v274, 7
        %v276 = vstv %s273
        %v277 = vadd.s32 %v276, %v275
        %vm278 = vcmp.lt.s32.totalorder %v277, 8
        %v279 = vmul.f32 %v252, %v271
        %v280 = vmul.f32 %v279, %v265
        %v281 = vsel %vm278, %v280, 0.0
        %v282 = vld [vmem:[#allocation2] sm:$0xff]
        %v283 = vadd.f32 %v282, %v281
        %vm284 = vcmask 7168
        %285 = vst.msk [vmem:[#allocation2] sm:$0xff] %vm284, %v283
        // Predicated region
        $region37: #{tpu_custom_call.1} parent=31 // pred_check
          %p286 = pneg %p223
        $region38: #{tpu_custom_call.1} parent=31 // pred_check_branch
          %288 = sbr.rel (%p286) target = $region40
        $region39: #{tpu_custom_call.1} parent=31 // pred_region
          %v289 = vld [vmem:[#allocation2] sm:$0xff]
          %v290 = vsel %vm284, %v289, 0.0
          %291 = vadd.xlane.f32.xlu0 %v290
          %v292 = vpop.xlane.xlu0 %291
          %v293 = vrot.slane %v292, 4
          %v294 = vadd.f32 %v292, %v293
          %v295 = vrot.slane %v294, 2
          %v296 = vadd.f32 %v294, %v295
          %v297 = vrot.slane %v296, 1
          %v298 = vadd.f32 %v296, %v297
          %s299 = vtos %v298
          %v300 = vstv %s299
          %301 = vst [vmem:[%s206] sm:$0xff] %v300
        $region40: #{tpu_custom_call.1} parent=31 // pred_fallthru
          _
        %s302 = sand.u32 %s118, 1
        %s303 = scalar_lea.sflag [#allocation4], %s302
        %s304 = sand.u32 %s118, 1
        %s305 = smul.addr %s304, 8
        %s306 = scalar_lea.vmem [#allocation3], %s305
        // Predicated region
        $region41: #{tpu_custom_call.1} parent=31 // pred_check
          %p307 = pneg %p128
        $region42: #{tpu_custom_call.1} parent=31 // pred_check_branch
          %309 = sbr.rel (%p307) target = $region44
        $region43: #{tpu_custom_call.1} parent=31 // pred_region
          %s311 = ssub.s32 128, 128
          %312 = vsyncadd %s303, %s311
          %s313 = smul.addr %s21, 128
          %s314 = scalar_lea.hbm %s3, %s313
          %s316 = sshll.u32 %s306, 4
          %s317 = int_to_ptr.vmem [resolvable:$true] %s316
          %319 = dma.vmem_to_hbm [thread:$0]  %s317, 128, %s314, %s303
        $region44: #{tpu_custom_call.1} parent=31 // pred_fallthru
          _
      $region32: #{tpu_custom_call.1} parent=5 // pred_fallthru
        _
      %p320 = scmp.le.s32.totalorder 2, %s12
      // Predicated region
      $region45: #{tpu_custom_call.1} parent=5 // pred_check
        %p321 = pneg %p320
      $region46: #{tpu_custom_call.1} parent=5 // pred_check_branch
        %323 = sbr.rel (%p321) target = $region48
      $region47: #{tpu_custom_call.1} parent=5 // pred_region
        %s324 = ssub.s32 %s12, 2
        // Predicated region
        $region49: #{tpu_custom_call.1} parent=47 // pred_check
          %p325 = pneg %p134
        $region50: #{tpu_custom_call.1} parent=47 // pred_check_branch
          %327 = sbr.rel (%p325) target = $region52
        $region51: #{tpu_custom_call.1} parent=47 // pred_region
          %s328 = sand.u32 %s119, 1
          %s329 = scalar_lea.sflag [#allocation4], %s328
          %s330 = sand.u32 %s119, 1
          %s331 = smul.addr %s330, 8
          %s332 = scalar_lea.vmem [#allocation3], %s331
          %333 = dma.done %s329, 128
        $region52: #{tpu_custom_call.1} parent=47 // pred_fallthru
          _
      $region48: #{tpu_custom_call.1} parent=5 // pred_fallthru
        _
    $region6: #{tpu_custom_call.1} parent=1 // loop_footer
      %s16 = sadd.s32 1, %s12
    $region7: #{tpu_custom_call.1} parent=1 // loop_footer_branch
      %11 = sbr.rel target = $region3
    $region8: #{tpu_custom_call.1} parent=1 // loop_exit
      _
    %334 = vsyncpa [#allocation4], 1
    %s335 = scalar_lea.sflag [#allocation4], 1
    %336 = vsyncpa %s335, 1

</llo_original>
